<compile_context>
chip_gen: v5e
topology: v5e:2x2
jax: 0.10.0
libtpu: 0.0.40
codegen_flags: <defaults>
</compile_context>

<pallas_src>
import functools
import math

import jax
import jax.numpy as jnp
from jax import lax
from jax.experimental import pallas as pl
from jax.experimental.pallas import tpu as pltpu


# ---------------------------------------------------------------------------
# Fused kernel: SiLU + Linear (modulation params) + LayerNorm + modulate
# ---------------------------------------------------------------------------
def _ada_ln_kernel(emb_row_ref, w_ref, b_ref, x_ref, o_ref, *, eps: float):
    """Per grid step:
         emb_row_ref: (1, E)    selected timestep embedding row
         w_ref:       (E, 2E)   linear weight (transposed), resident in VMEM
         b_ref:       (1, 2E)   linear bias, resident in VMEM
         x_ref:       (TM, E)   row tile of the flattened input
         o_ref:       (TM, E)   row tile of the output
    """
    e_dim = x_ref.shape[-1]

    # --- timestep modulation params (tiny MXU matmul, recomputed per step so
    # the row-tile axis has no cross-step dependency) -------------------------
    e = emb_row_ref[...]
    e = e * jax.nn.sigmoid(e)                                   # SiLU (EUP/VPU)
    proj = jnp.dot(e, w_ref[...], preferred_element_type=jnp.float32)
    proj = proj + b_ref[...].astype(jnp.float32)                # (1, 2E), f32
    scale = proj[:, :e_dim]                                     # (1, E)
    shift = proj[:, e_dim:]                                     # (1, E)
    one_plus_scale = 1.0 + scale

    # --- LayerNorm over the feature axis (single-pass stats, f32) ------------
    x = x_ref[...].astype(jnp.float32)                          # (TM, E)
    mean = jnp.mean(x, axis=-1, keepdims=True)                  # (TM, 1)
    var = jnp.mean(x * x, axis=-1, keepdims=True) - mean * mean
    var = jnp.maximum(var, 0.0)                                 # guard cancellation
    inv_std = lax.rsqrt(var + eps)                              # (TM, 1), EUP

    # Fold normalize + modulate into two FMAs per element.
    a = inv_std                                                 # (TM, 1)
    b = -mean * inv_std                                         # (TM, 1)
    x_norm = x * a + b                                          # FMA
    out = x_norm * one_plus_scale + shift                       # FMA
    o_ref[...] = out.astype(o_ref.dtype)


def _pick_block_rows(n_rows: int, e_dim: int, dtype_bytes: int,
                     target_bytes: int = 1 << 20) -> int:
    """Row-tile size so one (TM, E) tile is ~<=1 MiB (bounded VMEM on all gens)."""
    tm = target_bytes // max(1, e_dim * dtype_bytes)
    tm = max(8, min(1024, (tm // 8) * 8))
    if n_rows <= tm:
        return n_rows                      # single full block (no padding needed)
    return tm


# ---------------------------------------------------------------------------
# Wrapper reproducing AdaLayerNorm.forward
# ---------------------------------------------------------------------------
def ada_layer_norm(x, timestep, emb_table, w_t, bias, *, eps: float = 1e-5):
    """x: (..., E); timestep: scalar index; emb_table: (num_emb, E);
    w_t: (E, 2E) (= nn.Linear weight transposed); bias: (2E,)."""
    orig_shape = x.shape
    E = orig_shape[-1]
    assert emb_table.shape[-1] == E
    assert w_t.shape == (E, 2 * E)
    assert bias.shape[-1] == 2 * E

    # Embedding row gather is a single-row index; done as plain-JAX glue.
    # TODO(synk): a data-dependent in-kernel gather (scalar prefetch) is possible
    # but adds no value for a single row.
    emb_row = emb_table[timestep].reshape(1, E)
    b2 = bias.reshape(1, 2 * E)

    x2 = x.reshape(-1, E)
    N = x2.shape[0]
    dtype_bytes = jnp.dtype(x.dtype).itemsize
    tm = _pick_block_rows(N, E, dtype_bytes)
    n_pad = pl.cdiv(N, tm) * tm
    if n_pad != N:
        x2 = jnp.pad(x2, ((0, n_pad - N), (0, 0)))
    grid_steps = n_pad // tm

    # Advisory cost estimate: pure streaming (read x once, write out once).
    bytes_accessed = int((2 * n_pad * E) * dtype_bytes
                         + (E * 2 * E + 3 * E) * dtype_bytes)
    flops = int(10 * n_pad * E + grid_steps * (2 * E * 2 * E))
    transcendentals = int(n_pad + grid_steps * E)

    out = pl.pallas_call(
        functools.partial(_ada_ln_kernel, eps=eps),
        out_shape=jax.ShapeDtypeStruct((n_pad, E), x.dtype),
        grid_spec=pltpu.PrefetchScalarGridSpec(
            num_scalar_prefetch=0,
            grid=(grid_steps,),
            in_specs=[
                pl.BlockSpec((1, E), lambda i: (0, 0)),          # emb row (resident)
                pl.BlockSpec((E, 2 * E), lambda i: (0, 0)),      # weight  (resident)
                pl.BlockSpec((1, 2 * E), lambda i: (0, 0)),      # bias    (resident)
                pl.BlockSpec((tm, E), lambda i: (i, 0)),         # x row tile
            ],
            out_specs=pl.BlockSpec((tm, E), lambda i: (i, 0)),
        ),
        compiler_params=pltpu.CompilerParams(
            dimension_semantics=("parallel",)),
        cost_estimate=pl.CostEstimate(
            flops=flops, transcendentals=transcendentals,
            bytes_accessed=bytes_accessed),
    )(emb_row, w_t, b2, x2)

    if n_pad != N:
        out = out[:N]
    return out.reshape(orig_shape)


# ---------------------------------------------------------------------------
# Pure-JAX reference (mirrors the PyTorch forward) for verification
# ---------------------------------------------------------------------------
def ada_layer_norm_ref(x, timestep, emb_table, w_t, bias, *, eps: float = 1e-5):
    e = emb_table[jnp.asarray(timestep)].reshape(-1)
    e = e * jax.nn.sigmoid(e)
    proj = e @ w_t + bias                       # (2E,)
    E = x.shape[-1]
    scale, shift = proj[:E], proj[E:]
    mean = x.mean(-1, keepdims=True)
    var = ((x - mean) ** 2).mean(-1, keepdims=True)
    x_norm = (x - mean) / jnp.sqrt(var + eps)
    return x_norm * (1.0 + scale) + shift


if __name__ == "__main__":
    # Small shapes consistent with the module: batch=2, seq=8, hidden=32.
    B, S = 2, 8
    embedding_dim = 32
    num_embeddings = 16
    eps = 1e-5

    key = jax.random.PRNGKey(0)
    kx, ke, kw, kb = jax.random.split(key, 4)

    x = jax.random.normal(kx, (B, S, embedding_dim), dtype=jnp.float32)
    emb_table = jax.random.normal(ke, (num_embeddings, embedding_dim),
                                  dtype=jnp.float32)

    # Deterministic nn.Linear(embedding_dim, 2*embedding_dim)-style init.
    bound = 1.0 / math.sqrt(embedding_dim)
    w = jax.random.uniform(kw, (2 * embedding_dim, embedding_dim),
                           minval=-bound, maxval=bound, dtype=jnp.float32)
    b = jax.random.uniform(kb, (2 * embedding_dim,),
                           minval=-bound, maxval=bound, dtype=jnp.float32)
    w_t = w.T  # (E, 2E) so the kernel computes emb @ W^T + b == nn.Linear

    timestep = 3  # scalar timestep index, as in the PyTorch forward

    out = ada_layer_norm(x, timestep, emb_table, w_t, b, eps=eps)
    out = jax.block_until_ready(out)

    ref = ada_layer_norm_ref(x, timestep, emb_table, w_t, b, eps=eps)
    assert out.shape == x.shape
    max_err = jnp.max(jnp.abs(out - ref))
    assert jnp.allclose(out, ref, atol=1e-4, rtol=1e-4), \
        f"max abs err {max_err}"

    print("KERNEL_OK")
</pallas_src>

<mosaic_0001>
module attributes {stable_mosaic.version = 11 : i64} {
  func.func @_ada_ln_kernel(%arg0: i32, %arg1: memref<1x32xf32, #tpu.memory_space<vmem>>, %arg2: memref<32x64xf32, #tpu.memory_space<vmem>>, %arg3: memref<1x64xf32, #tpu.memory_space<vmem>>, %arg4: memref<16x32xf32, #tpu.memory_space<vmem>>, %arg5: memref<16x32xf32, #tpu.memory_space<vmem>>) attributes {dimension_semantics = [#tpu.dimension_semantics<parallel>], iteration_bounds = array<i64: 1>, scalar_prefetch = 0 : i64, scratch_operands = 0 : i64, tpu.core_type = #tpu.core_type<tc>, window_params = [{pipeline_mode = #tpu.pipeline_mode<synchronous>, transform_indices = @transform_0, window_bounds = array<i64: 1, 32>}, {pipeline_mode = #tpu.pipeline_mode<synchronous>, transform_indices = @transform_1, window_bounds = array<i64: 32, 64>}, {pipeline_mode = #tpu.pipeline_mode<synchronous>, transform_indices = @transform_2, window_bounds = array<i64: 1, 64>}, {transform_indices = @transform_3, window_bounds = array<i64: 16, 32>}, {transform_indices = @transform_4, window_bounds = array<i64: 16, 32>}]} {
    %c0 = arith.constant 0 : index
    %c0_0 = arith.constant 0 : index
    %0 = vector.load %arg1[%c0, %c0_0] : memref<1x32xf32, #tpu.memory_space<vmem>>, vector<1x32xf32>
    %1 = arith.negf %0 : vector<1x32xf32>
    %2 = math.exp %1 : vector<1x32xf32>
    %cst = arith.constant 1.000000e+00 : f32
    %3 = vector.broadcast %cst : f32 to vector<1x32xf32>
    %4 = arith.addf %3, %2 : vector<1x32xf32>
    %5 = arith.divf %3, %4 : vector<1x32xf32>
    %6 = arith.mulf %0, %5 : vector<1x32xf32>
    %c0_1 = arith.constant 0 : index
    %c0_2 = arith.constant 0 : index
    %7 = vector.load %arg2[%c0_1, %c0_2] : memref<32x64xf32, #tpu.memory_space<vmem>>, vector<32x64xf32>
    %cst_3 = arith.constant dense<0.000000e+00> : vector<1x64xf32>
    %8 = tpu.matmul %6, %7, %cst_3 {dimension_numbers = #tpu.dot_dimension_numbers<[1], [0], [0], [1], [0, 0, 1, 1], [], []>} : vector<1x32xf32>, vector<32x64xf32>, vector<1x64xf32> -> vector<1x64xf32>
    %c0_4 = arith.constant 0 : index
    %c0_5 = arith.constant 0 : index
    %9 = vector.load %arg3[%c0_4, %c0_5] : memref<1x64xf32, #tpu.memory_space<vmem>>, vector<1x64xf32>
    %10 = arith.addf %8, %9 : vector<1x64xf32>
    %11 = vector.extract_strided_slice %10 {offsets = [0, 0], sizes = [1, 32], strides = [1, 1]} : vector<1x64xf32> to vector<1x32xf32>
    %12 = vector.extract_strided_slice %10 {offsets = [0, 32], sizes = [1, 32], strides = [1, 1]} : vector<1x64xf32> to vector<1x32xf32>
    %cst_6 = arith.constant 1.000000e+00 : f32
    %13 = vector.broadcast %cst_6 : f32 to vector<1x32xf32>
    %14 = arith.addf %13, %11 : vector<1x32xf32>
    %c0_7 = arith.constant 0 : index
    %c0_8 = arith.constant 0 : index
    %15 = vector.load %arg4[%c0_7, %c0_8] : memref<16x32xf32, #tpu.memory_space<vmem>>, vector<16x32xf32>
    %cst_9 = arith.constant dense<0.000000e+00> : vector<16xf32>
    %16 = vector.multi_reduction <add>, %15, %cst_9 [1] : vector<16x32xf32> to vector<16xf32>
    %17 = vector.shape_cast %16 : vector<16xf32> to vector<16x1xf32>
    %cst_10 = arith.constant 3.200000e+01 : f32
    %18 = vector.broadcast %cst_10 : f32 to vector<16x1xf32>
    %19 = arith.divf %17, %18 : vector<16x1xf32>
    %20 = arith.mulf %15, %15 : vector<16x32xf32>
    %cst_11 = arith.constant dense<0.000000e+00> : vector<16xf32>
    %21 = vector.multi_reduction <add>, %20, %cst_11 [1] : vector<16x32xf32> to vector<16xf32>
    %22 = vector.shape_cast %21 : vector<16xf32> to vector<16x1xf32>
    %cst_12 = arith.constant 3.200000e+01 : f32
    %23 = vector.broadcast %cst_12 : f32 to vector<16x1xf32>
    %24 = arith.divf %22, %23 : vector<16x1xf32>
    %25 = arith.mulf %19, %19 : vector<16x1xf32>
    %26 = arith.subf %24, %25 : vector<16x1xf32>
    %cst_13 = arith.constant 0.000000e+00 : f32
    %27 = vector.broadcast %cst_13 : f32 to vector<16x1xf32>
    %28 = arith.maximumf %26, %27 : vector<16x1xf32>
    %cst_14 = arith.constant 9.99999974E-6 : f32
    %29 = vector.broadcast %cst_14 : f32 to vector<16x1xf32>
    %30 = arith.addf %28, %29 : vector<16x1xf32>
    %31 = math.rsqrt %30 : vector<16x1xf32>
    %cst_15 = arith.constant 0.000000e+00 : f32
    %32 = vector.broadcast %cst_15 : f32 to vector<16x1xf32>
    %33 = arith.subf %32, %19 : vector<16x1xf32>
    %34 = arith.mulf %33, %31 : vector<16x1xf32>
    %35 = vector.broadcast %31 : vector<16x1xf32> to vector<16x32xf32>
    %36 = arith.mulf %15, %35 : vector<16x32xf32>
    %37 = vector.broadcast %34 : vector<16x1xf32> to vector<16x32xf32>
    %38 = arith.addf %36, %37 : vector<16x32xf32>
    %39 = vector.broadcast %14 : vector<1x32xf32> to vector<16x32xf32>
    %40 = arith.mulf %38, %39 : vector<16x32xf32>
    %41 = vector.broadcast %12 : vector<1x32xf32> to vector<16x32xf32>
    %42 = arith.addf %40, %41 : vector<16x32xf32>
    %c0_16 = arith.constant 0 : index
    %c0_17 = arith.constant 0 : index
    %43 = vector.load %arg5[%c0_16, %c0_17] : memref<16x32xf32, #tpu.memory_space<vmem>>, vector<16x32xf32>
    tpu.vector_store %arg5[%c0_16, %c0_17], %42 {strides = array<i32>} : memref<16x32xf32, #tpu.memory_space<vmem>>, vector<16x32xf32>,
    return
  }
  func.func @transform_0(%arg0: i32) -> (i32, i32) {
    %c0_i32 = arith.constant 0 : i32
    %c0_i32_0 = arith.constant 0 : i32
    %c0_i32_1 = arith.constant 0 : i32
    return %c0_i32, %c0_i32_0 : i32, i32
  }
  func.func @transform_1(%arg0: i32) -> (i32, i32) {
    %c0_i32 = arith.constant 0 : i32
    %c0_i32_0 = arith.constant 0 : i32
    %c0_i32_1 = arith.constant 0 : i32
    return %c0_i32, %c0_i32_0 : i32, i32
  }
  func.func @transform_2(%arg0: i32) -> (i32, i32) {
    %c0_i32 = arith.constant 0 : i32
    %c0_i32_0 = arith.constant 0 : i32
    %c0_i32_1 = arith.constant 0 : i32
    return %c0_i32, %c0_i32_0 : i32, i32
  }
  func.func @transform_3(%arg0: i32) -> (i32, i32) {
    %c0_i32 = arith.constant 0 : i32
    %c0_i32_0 = arith.constant 0 : i32
    return %arg0, %c0_i32 : i32, i32
  }
  func.func @transform_4(%arg0: i32) -> (i32, i32) {
    %c0_i32 = arith.constant 0 : i32
    %c0_i32_0 = arith.constant 0 : i32
    return %arg0, %c0_i32 : i32, i32
  }
}

</mosaic_0001>

<llo_original>
// kernel: tpu_custom_call.1
$region0: #{tpu_custom_call.1}
  #allocation0 [shape = 'u32[]', space=smem, size = 0x4, offset = 0x4, fixed_abs, tag = 'smem constant byte address 0x4 - core index']
  #allocation1 [shape = 'u32[72,128]{1,0:T(1,128)}', space=vmem, size = 0x9000, scoped, tag = 'internal scratch']
  %s0 = inlined_call_operand.hbm [shape: f32[1,32], index: 0, kind: input, shape index: {}]
  %s1 = inlined_call_operand.hbm [shape: f32[32,64], index: 1, kind: input, shape index: {}]
  %s2 = inlined_call_operand.vmem [shape: f32[1,64], index: 2, kind: input, shape index: {}]
  %s3 = inlined_call_operand.hbm [shape: f32[16,32], index: 3, kind: input, shape index: {}]
  %s4 = inlined_call_operand.hbm [shape: f32[16,32], index: 4, kind: output, shape index: {}]
  %s5 = sld [smem:[#allocation0]]
  $region38: #{tpu_custom_call.1} parent=0
    _
  %s7 = ssub.s32 1, %s5
  %s8 = scalar_select 0, %s7, %s5
  $region1: #{tpu_custom_call.1} parent=0
    #allocation2 [shape = 'u8[512]{0}', space=vmem, size = 0x400, scoped, tag = 'input window, operand 0, single buffered']
    #allocation3 [shape = 's32[1]{0}', space=sflag, size = 0x4, scoped, tag = 'scoped memory for tpu_custom_call.1']
    #allocation4 [shape = 's32[1]{0}', space=sflag, size = 0x4, scoped, tag = 'scoped memory for tpu_custom_call.1']
    #allocation5 [shape = 'u8[16384]{0}', space=vmem, size = 0x4000, scoped, tag = 'input window, operand 1, single buffered']
    #allocation6 [shape = 's32[1]{0}', space=sflag, size = 0x4, scoped, tag = 'scoped memory for tpu_custom_call.1']
    #allocation7 [shape = 'u8[8192]{0}', space=vmem, size = 0x2000, scoped, tag = 'input window, operand 3, single buffered']
    #allocation8 [shape = 'u8[8192]{0}', space=vmem, size = 0x2000, scoped, tag = 'output window, operand 0, single buffered']
    %9 = vsyncpa [#allocation3], 0
    %10 = vsyncpa [#allocation6], 0
    %11 = vsyncpa [#allocation4], 0
    // Predicated region
    $region2: #{tpu_custom_call.1} parent=1 // pred_check
      _
    $region3: #{tpu_custom_call.1} parent=1 // pred_check_branch
      %13 = sbr.rel (0) target = $region5
    $region4: #{tpu_custom_call.1} parent=1 // pred_region
      %15 = vsyncadd [#allocation3], 0
      %s17 = sshll.u32 %s0, 4
      %s18 = int_to_ptr.hbm [resolvable:$true] %s17
      %s19 = sshll.u32 [#allocation2], 4
      %s20 = int_to_ptr.vmem [resolvable:$true] %s19
      %22 = dma.hbm_to_vmem [thread:$0]  %s18, 16, %s20, [#allocation3]
    $region5: #{tpu_custom_call.1} parent=1 // pred_fallthru
      _
    // Predicated region
    $region6: #{tpu_custom_call.1} parent=1 // pred_check
      _
    $region7: #{tpu_custom_call.1} parent=1 // pred_check_branch
      %24 = sbr.rel (0) target = $region9
    $region8: #{tpu_custom_call.1} parent=1 // pred_region
      %26 = vsyncadd [#allocation6], 0
      %s27 = sshll.u32 %s1, 4
      %s28 = int_to_ptr.hbm [resolvable:$true] %s27
      %s29 = sshll.u32 [#allocation5], 4
      %s30 = int_to_ptr.vmem [resolvable:$true] %s29
      %35 = dma.hbm_to_vmem [thread:$0]  %s28, 512, %s30, [#allocation6], 128, 128, 8
    $region9: #{tpu_custom_call.1} parent=1 // pred_fallthru
      _
    // Predicated region
    $region10: #{tpu_custom_call.1} parent=1 // pred_check
      _
    $region11: #{tpu_custom_call.1} parent=1 // pred_check_branch
      %37 = sbr.rel (0) target = $region13
    $region12: #{tpu_custom_call.1} parent=1 // pred_region
      _
    $region13: #{tpu_custom_call.1} parent=1 // pred_fallthru
      _
    // Predicated region
    $region14: #{tpu_custom_call.1} parent=1 // pred_check
      _
    $region15: #{tpu_custom_call.1} parent=1 // pred_check_branch
      %39 = sbr.rel (0) target = $region17
    $region16: #{tpu_custom_call.1} parent=1 // pred_region
      %41 = vsyncadd [#allocation6], 0
      %s42 = sshll.u32 %s3, 4
      %s43 = int_to_ptr.hbm [resolvable:$true] %s42
      %s44 = sshll.u32 [#allocation7], 4
      %s45 = int_to_ptr.vmem [resolvable:$true] %s44
      %50 = dma.hbm_to_vmem [thread:$0]  %s43, 256, %s45, [#allocation6], 128, 128, 8
    $region17: #{tpu_custom_call.1} parent=1 // pred_fallthru
      _
    // Predicated region
    $region18: #{tpu_custom_call.1} parent=1 // pred_check
      _
    $region19: #{tpu_custom_call.1} parent=1 // pred_check_branch
      %52 = sbr.rel (0) target = $region21
    $region20: #{tpu_custom_call.1} parent=1 // pred_region
      %54 = dma.done [#allocation3], 16
    $region21: #{tpu_custom_call.1} parent=1 // pred_fallthru
      _
    // Predicated region
    $region22: #{tpu_custom_call.1} parent=1 // pred_check
      _
    $region23: #{tpu_custom_call.1} parent=1 // pred_check_branch
      %56 = sbr.rel (0) target = $region25
    $region24: #{tpu_custom_call.1} parent=1 // pred_region
      %58 = dma.done [#allocation6], 512
    $region25: #{tpu_custom_call.1} parent=1 // pred_fallthru
      _
    // Predicated region
    $region26: #{tpu_custom_call.1} parent=1 // pred_check
      _
    $region27: #{tpu_custom_call.1} parent=1 // pred_check_branch
      %60 = sbr.rel (0) target = $region29
    $region28: #{tpu_custom_call.1} parent=1 // pred_region
      %62 = dma.done [#allocation6], 256
    $region29: #{tpu_custom_call.1} parent=1 // pred_fallthru
      _
    %v63 = vld [vmem:[#allocation2] sm:$0x1]
    %v64 = vxor.u32 %v63, 2147483648
    %v65 = vmul.f32 %v64, 1.442695
    %v66 = vpow.pop %v65
    %v67 = vadd.f32 %v66, 1.0
    %v68 = vrcp.pop %v67
    %v69 = vmul.f32 %v67, %v68
    %v70 = vsub.f32 1.0, %v69
    %v71 = vmul.f32 %v68, %v70
    %v72 = vadd.f32 %v68, %v71
    %vm73 = vweird.f32 %v67
    %vm74 = vweird.f32 %v68
    %vm75 = vmor %vm73, %vm74
    %v76 = vsel %vm75, %v68, %v72
    %v77 = vand.u32 2147483647, %v67
    %vm78 = vcmp.eq.f32.partialorder %v77, 8.507059e+37
    %v79 = vand.u32 %v67, 2147483648
    %v80 = vor.u32 1.1754944e-38, %v79
    %v81 = vsel %vm78, %v80, %v76
    %v82 = vmul.f32 1.0, %v81
    %v83 = vmul.f32 %v63, %v82
    %v84 = vld [vmem:[#allocation5] sm:$0xff]
    %v85 = vld [vmem:[#allocation5 + $0x8] sm:$0xff]
    %v86 = vld [vmem:[#allocation5 + $0x10] sm:$0xff]
    %v87 = vld [vmem:[#allocation5 + $0x18] sm:$0xff]
    %v88 = vld [vmem:[%s2] sm:$0x1]
    %vm89 = vcmask 261120
    %v91 = vsel %vm89, %v83, 0
    %93 = vmatpush.msra.mxu0 0.0
    %94 = vmatpush.msra.mxu0 0.0
    %95 = vmatpush.msra.mxu0 0.0
    %96 = vmatpush.msra.mxu0 0.0
    %97 = vmatpush.msra.mxu0 0.0
    %98 = vmatpush.msra.mxu0 0.0
    %99 = vmatpush.msra.mxu0 0.0
    %100 = vmatpush.msra.mxu0 0.0
    %101 = vmatpush.msra.mxu0 0.0
    %102 = vmatpush.msra.mxu0 0.0
    %103 = vmatpush.msra.mxu0 0.0
    %104 = vmatpush.msra.mxu0 0.0
    %105 = vmatpush.msra.mxu0 %v87
    %106 = vmatpush.msra.mxu0 %v86
    %107 = vmatpush.msra.mxu0 %v85
    %108 = vmatpush.msra.mxu0 %v84
    %109 = vmatmul.f32.gmra.mxu0 %v91
    %v110 = vpop.f32.mrf.mxu0
    %v111 = vadd.f32 %v88, %v110
    %112 = vdwg.mxu0
    %v113 = vadd.f32 %v111, 1.0
    %v114 = vld [vmem:[#allocation7] sm:$0xff]
    %v115 = vld [vmem:[#allocation7 + $0x8] sm:$0xff]
    %v116 = vsel %vm89, %v114, 0.0
    %117 = vadd.xlane.f32.xlu0 %v116
    %v118 = vpop.xlane.xlu0 %117
    %v119 = vsel %vm89, %v115, 0.0
    %120 = vadd.xlane.f32.xlu0 %v119
    %v121 = vpop.xlane.xlu0 %120
    %v122 = vrcp.pop 32.0
    %v123 = vmul.f32 32.0, %v122
    %v124 = vsub.f32 1.0, %v123
    %v125 = vmul.f32 %v122, %v124
    %v126 = vadd.f32 %v122, %v125
    %vm127 = vweird.f32 %v122
    %v128 = vsel %vm127, %v122, %v126
    %v129 = vmul.f32 %v118, %v128
    %v130 = vmul.f32 %v121, %v128
    %v131 = vmul.f32 %v114, %v114
    %v132 = vmul.f32 %v115, %v115
    %v133 = vsel %vm89, %v131, 0.0
    %134 = vadd.xlane.f32.xlu0 %v133
    %v135 = vpop.xlane.xlu0 %134
    %v136 = vsel %vm89, %v132, 0.0
    %137 = vadd.xlane.f32.xlu0 %v136
    %v138 = vpop.xlane.xlu0 %137
    %v139 = vmul.f32 %v135, %v128
    %v140 = vmul.f32 %v138, %v128
    %v141 = vmul.f32 %v129, %v129
    %v142 = vmul.f32 %v130, %v130
    %v143 = vsub.f32 %v139, %v141
    %v144 = vsub.f32 %v140, %v142
    %v145 = vmax.f32 %v143, 0.0
    %v146 = vmax.f32 %v144, 0.0
    %v147 = vadd.f32 %v145, 1e-05
    %v148 = vadd.f32 %v146, 1e-05
    %v149 = vrsqrt.pop %v147
    %v150 = vmul.f32 %v149, %v147
    %v151 = vmul.f32 %v150, %v149
    %v152 = vmul.f32 0.5, %v151
    %v153 = vsub.f32 1.5, %v152
    %v154 = vmul.f32 %v149, %v153
    %vm155 = vweird.f32 %v147
    %vm156 = vweird.f32 %v149
    %vm157 = vmor %vm155, %vm156
    %v158 = vsel %vm157, %v149, %v154
    %v159 = vrsqrt.pop %v148
    %v160 = vmul.f32 %v159, %v148
    %v161 = vmul.f32 %v160, %v159
    %v162 = vmul.f32 0.5, %v161
    %v163 = vsub.f32 1.5, %v162
    %v164 = vmul.f32 %v159, %v163
    %vm165 = vweird.f32 %v148
    %vm166 = vweird.f32 %v159
    %vm167 = vmor %vm165, %vm166
    %v168 = vsel %vm167, %v159, %v164
    %v169 = vsub.f32 0.0, %v129
    %v170 = vsub.f32 0.0, %v130
    %v171 = vmul.f32 %v169, %v158
    %v172 = vmul.f32 %v170, %v168
    %v173 = vmul.f32 %v114, %v158
    %v174 = vmul.f32 %v115, %v168
    %v175 = vadd.f32 %v173, %v171
    %v176 = vadd.f32 %v174, %v172
    %v177 = vperm.slane %v113, 0
    %v178 = vmul.f32 %v175, %v177
    %v179 = vmul.f32 %v176, %v177
    %v180 = vperm.slane %v111, 0
    %182 = vrot.lane.b32.xlu0 %v180, 96
    %v183 = vpop.permute.xlu0 %182
    %v185 = vadd.f32 %v178, %v183
    %v186 = vadd.f32 %v179, %v183
    %187 = vst.msk [vmem:[#allocation8] sm:$0xff] %vm89, %v185
    %188 = vst.msk [vmem:[#allocation8 + $0x8] sm:$0xff] %vm89, %v186
    // Predicated region
    $region30: #{tpu_custom_call.1} parent=1 // pred_check
      _
    $region31: #{tpu_custom_call.1} parent=1 // pred_check_branch
      %190 = sbr.rel (0) target = $region33
    $region32: #{tpu_custom_call.1} parent=1 // pred_region
      %192 = vsyncadd [#allocation4], 0
      %s193 = sshll.u32 [#allocation8], 4
      %s194 = int_to_ptr.vmem [resolvable:$true] %s193
      %s195 = sshll.u32 %s4, 4
      %s196 = int_to_ptr.hbm [resolvable:$true] %s195
      %201 = dma.vmem_to_hbm [thread:$0]  %s194, 256, %s196, [#allocation4], 128, 128, 8
    $region33: #{tpu_custom_call.1} parent=1 // pred_fallthru
      _
    // Predicated region
    $region34: #{tpu_custom_call.1} parent=1 // pred_check
      _
    $region35: #{tpu_custom_call.1} parent=1 // pred_check_branch
      %203 = sbr.rel (0) target = $region37
    $region36: #{tpu_custom_call.1} parent=1 // pred_region
      %205 = dma.done [#allocation4], 256
    $region37: #{tpu_custom_call.1} parent=1 // pred_fallthru
      _
    %206 = vsyncpa [#allocation3], 1
    %207 = vsyncpa [#allocation6], 1
    %208 = vsyncpa [#allocation4], 1

</llo_original>
